<compile_context>
chip_gen: v5e
topology: v5e:2x2
jax: 0.10.0
libtpu: 0.0.40
codegen_flags: <defaults>
</compile_context>

<pallas_src>
import math

import jax
import jax.numpy as jnp
from jax.experimental import pallas as pl
from jax.experimental.pallas import tpu as pltpu


def _round_up(x, m):
    return ((x + m - 1) // m) * m


# ----------------------------- Pallas kernel --------------------------------
def _edge_mlp_kernel(src_ref, dst_ref, h_ref, w_ref, b_ref, o_ref):
    """score_tile = concat(h[src], h[dst]) @ W_cat + b   (all f32, exact)."""
    tile = src_ref.shape[0]
    n_pad = h_ref.shape[0]
    c = o_ref.shape[1]

    # One-hot row selectors for this edge tile (gather via MXU, exact in f32).
    node_iota = jax.lax.broadcasted_iota(jnp.int32, (tile, n_pad), 1)
    onehot_u = (src_ref[...] == node_iota).astype(jnp.float32)   # [tile, n_pad]
    onehot_v = (dst_ref[...] == node_iota).astype(jnp.float32)

    h = h_ref[...]                                               # [n_pad, d_pad]
    h_u = jnp.dot(onehot_u, h, preferred_element_type=jnp.float32)
    h_v = jnp.dot(onehot_v, h, preferred_element_type=jnp.float32)

    # Single fused K = 2*d_pad matmul (fills the 256-deep MXU on v6e/v7x).
    h_cat = jnp.concatenate([h_u, h_v], axis=-1)                 # [tile, 2*d_pad]
    acc = jnp.dot(h_cat, w_ref[...], preferred_element_type=jnp.float32)
    acc = acc + b_ref[...]

    # Store only the real C columns (masked vst; ~25x less write traffic).
    o_ref[...] = acc[:, :c]


# ----------------------------- wrapper ---------------------------------------
def mlp_predictor(h, src, dst, W, b, *, edge_tile=1024):
    """Edge scores for MLPPredictor.

    h:   [N, d_in] f32 node features
    src: [E] int32 edge source node ids
    dst: [E] int32 edge destination node ids
    W:   [2 * d_in, C] f32  (transposed nn.Linear weight: [in, out])
    b:   [C] f32
    returns [E, C] f32 edge scores.
    """
    N, d_in = h.shape
    E = src.shape[0]
    C = b.shape[-1]

    edge_tile = max(8, _round_up(edge_tile, 8))
    d_pad = _round_up(d_in, 128)    # K padding only on VMEM-resident operands
    c_pad = _round_up(C, 128)       # lane-dense weight / accumulator in VMEM
    n_pad = _round_up(N, 128)       # lane-dense one-hot
    e_pad = _round_up(E, edge_tile)

    # Resident (read-once, tiny) operands, padded to MXU-friendly shapes.
    h_pad = jnp.zeros((n_pad, d_pad), jnp.float32).at[:N, :d_in].set(
        h.astype(jnp.float32))
    w_cat = jnp.zeros((2 * d_pad, c_pad), jnp.float32)
    w_cat = w_cat.at[:d_in, :C].set(W[:d_in].astype(jnp.float32))
    w_cat = w_cat.at[d_pad:d_pad + d_in, :C].set(W[d_in:].astype(jnp.float32))
    b_pad = jnp.zeros((1, c_pad), jnp.float32).at[0, :C].set(b.astype(jnp.float32))

    # Per-edge node ids as [e_pad, 1] columns (sublane-oriented in the kernel).
    # Padded edges alias node 0; their rows are sliced off below.
    src_col = jnp.zeros((e_pad, 1), jnp.int32).at[:E, 0].set(src.astype(jnp.int32))
    dst_col = jnp.zeros((e_pad, 1), jnp.int32).at[:E, 0].set(dst.astype(jnp.int32))

    grid = (pl.cdiv(e_pad, edge_tile),)

    out = pl.pallas_call(
        _edge_mlp_kernel,
        out_shape=jax.ShapeDtypeStruct((e_pad, C), jnp.float32),
        grid=grid,
        in_specs=[
            pl.BlockSpec((edge_tile, 1), lambda i: (i, 0)),        # src ids
            pl.BlockSpec((edge_tile, 1), lambda i: (i, 0)),        # dst ids
            pl.BlockSpec((n_pad, d_pad), lambda i: (0, 0)),        # h (resident)
            pl.BlockSpec((2 * d_pad, c_pad), lambda i: (0, 0)),    # W_cat (resident)
            pl.BlockSpec((1, c_pad), lambda i: (0, 0)),            # bias (resident)
        ],
        out_specs=pl.BlockSpec((edge_tile, C), lambda i: (i, 0)),
        compiler_params=pltpu.CompilerParams(
            dimension_semantics=("parallel",),
        ),
    )(src_col, dst_col, h_pad, w_cat, b_pad)

    return out[:E]


# ----------------------------- reference --------------------------------------
def _ref_forward(h, src, dst, W, b):
    v = jnp.concatenate([jnp.take(h, src, axis=0), jnp.take(h, dst, axis=0)], axis=-1)
    return jnp.dot(v, W, precision=jax.lax.Precision.HIGHEST) + b


# ----------------------------- main --------------------------------------------
if __name__ == "__main__":
    key = jax.random.PRNGKey(0)
    N, E = 64, 300                 # nodes, edges
    in_features, out_classes = 16, 5

    k_h, k_src, k_dst, k_w, k_b = jax.random.split(key, 5)
    h = jax.random.normal(k_h, (N, in_features), jnp.float32)
    src = jax.random.randint(k_src, (E,), 0, N, dtype=jnp.int32)
    dst = jax.random.randint(k_dst, (E,), 0, N, dtype=jnp.int32)

    # nn.Linear(in_features * 2, out_classes) default init; weight stored
    # transposed as [2 * in_features, out_classes].
    bound = 1.0 / math.sqrt(2 * in_features)
    W = jax.random.uniform(k_w, (2 * in_features, out_classes), jnp.float32, -bound, bound)
    b = jax.random.uniform(k_b, (out_classes,), jnp.float32, -bound, bound)

    # Small edge_tile in the demo so the grid has several steps (pipelining
    # exercised); at real edge counts keep the 1024 default (sweep 512-2048).
    score = mlp_predictor(h, src, dst, W, b, edge_tile=128)
    score = jax.block_until_ready(score)

    ref = _ref_forward(h, src, dst, W, b)
    assert score.shape == (E, out_classes), score.shape
    # f32 operands end to end -> tight tolerance vs. the f32 reference.
    assert jnp.allclose(score, ref, atol=1e-2, rtol=1e-2), \
        float(jnp.max(jnp.abs(score - ref)))

    print("KERNEL_OK")
</pallas_src>

<mosaic_0001>
module attributes {stable_mosaic.version = 11 : i64} {
  func.func @_edge_mlp_kernel(%arg0: i32, %arg1: memref<128x1xi32, #tpu.memory_space<vmem>>, %arg2: memref<128x1xi32, #tpu.memory_space<vmem>>, %arg3: memref<128x128xf32, #tpu.memory_space<vmem>>, %arg4: memref<256x128xf32, #tpu.memory_space<vmem>>, %arg5: memref<1x128xf32, #tpu.memory_space<vmem>>, %arg6: memref<128x5xf32, #tpu.memory_space<vmem>>) attributes {dimension_semantics = [#tpu.dimension_semantics<parallel>], iteration_bounds = array<i64: 3>, scalar_prefetch = 0 : i64, scratch_operands = 0 : i64, tpu.core_type = #tpu.core_type<tc>, window_params = [{transform_indices = @transform_0, window_bounds = array<i64: 128, 1>}, {transform_indices = @transform_1, window_bounds = array<i64: 128, 1>}, {pipeline_mode = #tpu.pipeline_mode<synchronous>, transform_indices = @transform_2, window_bounds = array<i64: 128, 128>}, {pipeline_mode = #tpu.pipeline_mode<synchronous>, transform_indices = @transform_3, window_bounds = array<i64: 256, 128>}, {pipeline_mode = #tpu.pipeline_mode<synchronous>, transform_indices = @transform_4, window_bounds = array<i64: 1, 128>}, {transform_indices = @transform_5, window_bounds = array<i64: 128, 5>}]} {
    %0 = tpu.iota {dimensions = array<i32: 1>} : vector<128x128xi32>
    %c0 = arith.constant 0 : index
    %c0_0 = arith.constant 0 : index
    %1 = vector.load %arg1[%c0, %c0_0] : memref<128x1xi32, #tpu.memory_space<vmem>>, vector<128x1xi32>
    %2 = vector.broadcast %1 : vector<128x1xi32> to vector<128x128xi32>
    %3 = arith.cmpi eq, %2, %0 : vector<128x128xi32>
    %4 = arith.extui %3 : vector<128x128xi1> to vector<128x128xi32>
    %5 = arith.sitofp %4 : vector<128x128xi32> to vector<128x128xf32>
    %c0_1 = arith.constant 0 : index
    %c0_2 = arith.constant 0 : index
    %6 = vector.load %arg2[%c0_1, %c0_2] : memref<128x1xi32, #tpu.memory_space<vmem>>, vector<128x1xi32>
    %7 = vector.broadcast %6 : vector<128x1xi32> to vector<128x128xi32>
    %8 = arith.cmpi eq, %7, %0 : vector<128x128xi32>
    %9 = arith.extui %8 : vector<128x128xi1> to vector<128x128xi32>
    %10 = arith.sitofp %9 : vector<128x128xi32> to vector<128x128xf32>
    %c0_3 = arith.constant 0 : index
    %c0_4 = arith.constant 0 : index
    %11 = vector.load %arg3[%c0_3, %c0_4] : memref<128x128xf32, #tpu.memory_space<vmem>>, vector<128x128xf32>
    %cst = arith.constant dense<0.000000e+00> : vector<128x128xf32>
    %12 = tpu.matmul %5, %11, %cst {dimension_numbers = #tpu.dot_dimension_numbers<[1], [0], [0], [1], [0, 0, 1, 1], [], []>} : vector<128x128xf32>, vector<128x128xf32>, vector<128x128xf32> -> vector<128x128xf32>
    %cst_5 = arith.constant dense<0.000000e+00> : vector<128x128xf32>
    %13 = tpu.matmul %10, %11, %cst_5 {dimension_numbers = #tpu.dot_dimension_numbers<[1], [0], [0], [1], [0, 0, 1, 1], [], []>} : vector<128x128xf32>, vector<128x128xf32>, vector<128x128xf32> -> vector<128x128xf32>
    %14 = tpu.concatenate %12, %13 in 1 : vector<128x128xf32>, vector<128x128xf32> -> vector<128x256xf32>
    %c0_6 = arith.constant 0 : index
    %c0_7 = arith.constant 0 : index
    %15 = vector.load %arg4[%c0_6, %c0_7] : memref<256x128xf32, #tpu.memory_space<vmem>>, vector<256x128xf32>
    %cst_8 = arith.constant dense<0.000000e+00> : vector<128x128xf32>
    %16 = tpu.matmul %14, %15, %cst_8 {dimension_numbers = #tpu.dot_dimension_numbers<[1], [0], [0], [1], [0, 0, 1, 1], [], []>} : vector<128x256xf32>, vector<256x128xf32>, vector<128x128xf32> -> vector<128x128xf32>
    %c0_9 = arith.constant 0 : index
    %c0_10 = arith.constant 0 : index
    %17 = vector.load %arg5[%c0_9, %c0_10] : memref<1x128xf32, #tpu.memory_space<vmem>>, vector<1x128xf32>
    %18 = vector.broadcast %17 : vector<1x128xf32> to vector<128x128xf32>
    %19 = arith.addf %16, %18 : vector<128x128xf32>
    %20 = vector.extract_strided_slice %19 {offsets = [0, 0], sizes = [128, 5], strides = [1, 1]} : vector<128x128xf32> to vector<128x5xf32>
    %c0_11 = arith.constant 0 : index
    %c0_12 = arith.constant 0 : index
    %21 = vector.load %arg6[%c0_11, %c0_12] : memref<128x5xf32, #tpu.memory_space<vmem>>, vector<128x5xf32>
    tpu.vector_store %arg6[%c0_11, %c0_12], %20 {strides = array<i32>} : memref<128x5xf32, #tpu.memory_space<vmem>>, vector<128x5xf32>,
    return
  }
  func.func @transform_0(%arg0: i32) -> (i32, i32) {
    %c0_i32 = arith.constant 0 : i32
    %c0_i32_0 = arith.constant 0 : i32
    return %arg0, %c0_i32 : i32, i32
  }
  func.func @transform_1(%arg0: i32) -> (i32, i32) {
    %c0_i32 = arith.constant 0 : i32
    %c0_i32_0 = arith.constant 0 : i32
    return %arg0, %c0_i32 : i32, i32
  }
  func.func @transform_2(%arg0: i32) -> (i32, i32) {
    %c0_i32 = arith.constant 0 : i32
    %c0_i32_0 = arith.constant 0 : i32
    %c0_i32_1 = arith.constant 0 : i32
    return %c0_i32, %c0_i32_0 : i32, i32
  }
  func.func @transform_3(%arg0: i32) -> (i32, i32) {
    %c0_i32 = arith.constant 0 : i32
    %c0_i32_0 = arith.constant 0 : i32
    %c0_i32_1 = arith.constant 0 : i32
    return %c0_i32, %c0_i32_0 : i32, i32
  }
  func.func @transform_4(%arg0: i32) -> (i32, i32) {
    %c0_i32 = arith.constant 0 : i32
    %c0_i32_0 = arith.constant 0 : i32
    %c0_i32_1 = arith.constant 0 : i32
    return %c0_i32, %c0_i32_0 : i32, i32
  }
  func.func @transform_5(%arg0: i32) -> (i32, i32) {
    %c0_i32 = arith.constant 0 : i32
    %c0_i32_0 = arith.constant 0 : i32
    return %arg0, %c0_i32 : i32, i32
  }
}

</mosaic_0001>

<llo_original>
// kernel: tpu_custom_call.1
$region0: #{tpu_custom_call.1}
  #allocation0 [shape = 'u32[]', space=smem, size = 0x4, offset = 0x4, fixed_abs, tag = 'smem constant byte address 0x4 - core index']
  #allocation1 [shape = 'u32[72,128]{1,0:T(1,128)}', space=vmem, size = 0x9000, scoped, tag = 'internal scratch']
  %s0 = inlined_call_operand.vmem [shape: s32[384,1], index: 0, kind: input, shape index: {}]
  %s1 = inlined_call_operand.vmem [shape: s32[384,1], index: 1, kind: input, shape index: {}]
  %s2 = inlined_call_operand.vmem [shape: f32[128,128], index: 2, kind: input, shape index: {}]
  %s3 = inlined_call_operand.vmem [shape: f32[256,128], index: 3, kind: input, shape index: {}]
  %s4 = inlined_call_operand.vmem [shape: f32[1,128], index: 4, kind: input, shape index: {}]
  %s5 = inlined_call_operand.vmem [shape: f32[384,5], index: 5, kind: output, shape index: {}]
  %s6 = sld [smem:[#allocation0]]
  $region53: #{tpu_custom_call.1} parent=0
    _
  %s8 = ssub.s32 1, %s6
  %s9 = scalar_select 0, %s8, %s6
  loop: start=0, step=1, limit=5
  $region2: #{tpu_custom_call.1} parent=0 // loop_pre_header
    _
  $region3: #{tpu_custom_call.1} parent=0 // loop_header
    %s11 = sphi 0, %s15
    %p12 = scmp.ge.s32.totalorder %s11, 5
    %s21 = sphi 0, %s23
    %s24 = sphi 0, %s21
    %s25 = sphi 0, %s24
    %s41 = sphi 0, %s25
    %s47 = sphi 0, %s49
    %s50 = sphi 0, %s47
    %s51 = sphi 0, %s50
    %s67 = sphi 0, %s51
    %s71 = sphi 0, %s71
    %s73 = sphi 0, %s71
    %s74 = sphi 0, %s73
    %s88 = sphi 0, %s74
    %s92 = sphi 0, %s92
    %s94 = sphi 0, %s92
    %s95 = sphi 0, %s94
    %s109 = sphi 0, %s95
    %s113 = sphi 0, %s113
    %s115 = sphi 0, %s113
    %s116 = sphi 0, %s115
    %s130 = sphi 0, %s116
    %s136 = sphi 0, %s138
    %s139 = sphi 0, %s136
    %s140 = sphi 0, %s139
    %s156 = sphi 0, %s140
  $region4: #{tpu_custom_call.1} parent=0 // loop_header_branch
    %14 = sbr.rel (%p12) target = $region8
  $region5: #{tpu_custom_call.1} parent=0 // loop_body
    %s16 = ssub.s32 %s11, 1
    %s17 = ssub.s32 %s11, 2
    %s18 = sadd.s32 %s11, 1
    %s19 = ssub.s32 %s11, %s18
    %p20 = scmp.eq.s32.totalorder %s19, 0
    %s22 = sadd.s32 %s21, 1
    %s23 = scalar_select %p20, %s21, %s22
    %p26 = pneg %p20
    %p27 = scmp.eq.s32.totalorder %s11, 2
    %p28 = por %p26, %p27
    %p29 = scmp.ne.s32.totalorder %s21, %s24
    %p30 = scmp.eq.s32.totalorder %s11, 0
    %p31 = por %p29, %p30
    %p32 = scmp.ne.s32.totalorder %s21, %s24
    %p33 = scmp.eq.s32.totalorder %s16, 2
    %p34 = por %p32, %p33
    %p35 = scmp.ne.s32.totalorder %s24, %s25
    %p36 = scmp.eq.s32.totalorder %s16, 0
    %p37 = por %p35, %p36
    %p38 = scmp.ne.s32.totalorder %s24, %s25
    %p39 = scmp.eq.s32.totalorder %s17, 2
    %p40 = por %p38, %p39
    %p42 = scmp.ne.s32.totalorder %s25, %s41
    %p43 = scmp.eq.s32.totalorder %s17, 0
    %p44 = por %p42, %p43
    %s45 = ssub.s32 %s11, %s18
    %p46 = scmp.eq.s32.totalorder %s45, 0
    %s48 = sadd.s32 %s47, 1
    %s49 = scalar_select %p46, %s47, %s48
    %p52 = pneg %p46
    %p53 = scmp.eq.s32.totalorder %s11, 2
    %p54 = por %p52, %p53
    %p55 = scmp.ne.s32.totalorder %s47, %s50
    %p56 = scmp.eq.s32.totalorder %s11, 0
    %p57 = por %p55, %p56
    %p58 = scmp.ne.s32.totalorder %s47, %s50
    %p59 = scmp.eq.s32.totalorder %s16, 2
    %p60 = por %p58, %p59
    %p61 = scmp.ne.s32.totalorder %s50, %s51
    %p62 = scmp.eq.s32.totalorder %s16, 0
    %p63 = por %p61, %p62
    %p64 = scmp.ne.s32.totalorder %s50, %s51
    %p65 = scmp.eq.s32.totalorder %s17, 2
    %p66 = por %p64, %p65
    %p68 = scmp.ne.s32.totalorder %s51, %s67
    %p69 = scmp.eq.s32.totalorder %s17, 0
    %p70 = por %p68, %p69
    %s72 = sadd.s32 %s71, 1
    %p75 = scmp.eq.s32.totalorder %s11, 2
    %p76 = scmp.ne.s32.totalorder %s71, %s73
    %p77 = scmp.eq.s32.totalorder %s11, 0
    %p78 = por %p76, %p77
    %p79 = scmp.ne.s32.totalorder %s71, %s73
    %p80 = scmp.eq.s32.totalorder %s16, 2
    %p81 = por %p79, %p80
    %p82 = scmp.ne.s32.totalorder %s73, %s74
    %p83 = scmp.eq.s32.totalorder %s16, 0
    %p84 = por %p82, %p83
    %p85 = scmp.ne.s32.totalorder %s73, %s74
    %p86 = scmp.eq.s32.totalorder %s17, 2
    %p87 = por %p85, %p86
    %p89 = scmp.ne.s32.totalorder %s74, %s88
    %p90 = scmp.eq.s32.totalorder %s17, 0
    %p91 = por %p89, %p90
    %s93 = sadd.s32 %s92, 1
    %p96 = scmp.eq.s32.totalorder %s11, 2
    %p97 = scmp.ne.s32.totalorder %s92, %s94
    %p98 = scmp.eq.s32.totalorder %s11, 0
    %p99 = por %p97, %p98
    %p100 = scmp.ne.s32.totalorder %s92, %s94
    %p101 = scmp.eq.s32.totalorder %s16, 2
    %p102 = por %p100, %p101
    %p103 = scmp.ne.s32.totalorder %s94, %s95
    %p104 = scmp.eq.s32.totalorder %s16, 0
    %p105 = por %p103, %p104
    %p106 = scmp.ne.s32.totalorder %s94, %s95
    %p107 = scmp.eq.s32.totalorder %s17, 2
    %p108 = por %p106, %p107
    %p110 = scmp.ne.s32.totalorder %s95, %s109
    %p111 = scmp.eq.s32.totalorder %s17, 0
    %p112 = por %p110, %p111
    %s114 = sadd.s32 %s113, 1
    %p117 = scmp.eq.s32.totalorder %s11, 2
    %p118 = scmp.ne.s32.totalorder %s113, %s115
    %p119 = scmp.eq.s32.totalorder %s11, 0
    %p120 = por %p118, %p119
    %p121 = scmp.ne.s32.totalorder %s113, %s115
    %p122 = scmp.eq.s32.totalorder %s16, 2
    %p123 = por %p121, %p122
    %p124 = scmp.ne.s32.totalorder %s115, %s116
    %p125 = scmp.eq.s32.totalorder %s16, 0
    %p126 = por %p124, %p125
    %p127 = scmp.ne.s32.totalorder %s115, %s116
    %p128 = scmp.eq.s32.totalorder %s17, 2
    %p129 = por %p127, %p128
    %p131 = scmp.ne.s32.totalorder %s116, %s130
    %p132 = scmp.eq.s32.totalorder %s17, 0
    %p133 = por %p131, %p132
    %s134 = ssub.s32 %s11, %s18
    %p135 = scmp.eq.s32.totalorder %s134, 0
    %s137 = sadd.s32 %s136, 1
    %s138 = scalar_select %p135, %s136, %s137
    %p141 = pneg %p135
    %p142 = scmp.eq.s32.totalorder %s11, 2
    %p143 = por %p141, %p142
    %p144 = scmp.ne.s32.totalorder %s136, %s139
    %p145 = scmp.eq.s32.totalorder %s11, 0
    %p146 = por %p144, %p145
    %p147 = scmp.ne.s32.totalorder %s136, %s139
    %p148 = scmp.eq.s32.totalorder %s16, 2
    %p149 = por %p147, %p148
    %p150 = scmp.ne.s32.totalorder %s139, %s140
    %p151 = scmp.eq.s32.totalorder %s16, 0
    %p152 = por %p150, %p151
    %p153 = scmp.ne.s32.totalorder %s139, %s140
    %p154 = scmp.eq.s32.totalorder %s17, 2
    %p155 = por %p153, %p154
    %p157 = scmp.ne.s32.totalorder %s140, %s156
    %p158 = scmp.eq.s32.totalorder %s17, 0
    %p159 = por %p157, %p158
    %p160 = scmp.le.s32.totalorder 1, %s11
    %p161 = scmp.lt.s32.totalorder %s11, 4
    %p162 = pnand %p160, %p161
    %p163 = pneg %p162
    // Predicated region
    $region9: #{tpu_custom_call.1} parent=5 // pred_check
      _
    $region10: #{tpu_custom_call.1} parent=5 // pred_check_branch
      %165 = sbr.rel (%p162) target = $region12
    $region11: #{tpu_custom_call.1} parent=5 // pred_region
      %s166 = ssub.s32 %s11, 1
      // Predicated region
      $region13: #{tpu_custom_call.1} parent=11 // pred_check
        %p167 = pneg %p84
      $region14: #{tpu_custom_call.1} parent=11 // pred_check_branch
        %169 = sbr.rel (%p167) target = $region16
      $region15: #{tpu_custom_call.1} parent=11 // pred_region
        _
      $region16: #{tpu_custom_call.1} parent=11 // pred_fallthru
        _
      // Predicated region
      $region17: #{tpu_custom_call.1} parent=11 // pred_check
        %p170 = pneg %p105
      $region18: #{tpu_custom_call.1} parent=11 // pred_check_branch
        %172 = sbr.rel (%p170) target = $region20
      $region19: #{tpu_custom_call.1} parent=11 // pred_region
        _
      $region20: #{tpu_custom_call.1} parent=11 // pred_fallthru
        _
      // Predicated region
      $region21: #{tpu_custom_call.1} parent=11 // pred_check
        %p173 = pneg %p126
      $region22: #{tpu_custom_call.1} parent=11 // pred_check_branch
        %175 = sbr.rel (%p173) target = $region24
      $region23: #{tpu_custom_call.1} parent=11 // pred_region
        _
      $region24: #{tpu_custom_call.1} parent=11 // pred_fallthru
        _
    $region12: #{tpu_custom_call.1} parent=5 // pred_fallthru
      _
    %p176 = scmp.lt.s32.totalorder %s11, 3
    // Predicated region
    $region25: #{tpu_custom_call.1} parent=5 // pred_check
      %p177 = pneg %p176
    $region26: #{tpu_custom_call.1} parent=5 // pred_check_branch
      %179 = sbr.rel (%p177) target = $region28
    $region27: #{tpu_custom_call.1} parent=5 // pred_region
      // Predicated region
      $region29: #{tpu_custom_call.1} parent=27 // pred_check
        %p180 = pneg %p31
      $region30: #{tpu_custom_call.1} parent=27 // pred_check_branch
        %182 = sbr.rel (%p180) target = $region32
      $region31: #{tpu_custom_call.1} parent=27 // pred_region
        %s183 = smul.u32 16, %s11
        %p184 = scmp.lt.s32.totalorder %s183, 47
        %s185 = scalar_select %p184, %s183, 47
        %s186 = smul.addr %s185, 8
        %s187 = scalar_lea.vmem %s0, %s186
        %s188 = smul.u32 16, %s11
      $region32: #{tpu_custom_call.1} parent=27 // pred_fallthru
        _
      // Predicated region
      $region33: #{tpu_custom_call.1} parent=27 // pred_check
        %p189 = pneg %p57
      $region34: #{tpu_custom_call.1} parent=27 // pred_check_branch
        %191 = sbr.rel (%p189) target = $region36
      $region35: #{tpu_custom_call.1} parent=27 // pred_region
        %s192 = smul.u32 16, %s11
        %p193 = scmp.lt.s32.totalorder %s192, 47
        %s194 = scalar_select %p193, %s192, 47
        %s195 = smul.addr %s194, 8
        %s196 = scalar_lea.vmem %s1, %s195
        %s197 = smul.u32 16, %s11
      $region36: #{tpu_custom_call.1} parent=27 // pred_fallthru
        _
    $region28: #{tpu_custom_call.1} parent=5 // pred_fallthru
      _
    %p198 = scmp.le.s32.totalorder 1, %s11
    %p199 = scmp.lt.s32.totalorder %s11, 4
    %p200 = pnand %p198, %p199
    %p201 = pneg %p200
    // Predicated region
    $region37: #{tpu_custom_call.1} parent=5 // pred_check
      _
    $region38: #{tpu_custom_call.1} parent=5 // pred_check_branch
      %203 = sbr.rel (%p200) target = $region40
    $region39: #{tpu_custom_call.1} parent=5 // pred_region
      %s204 = ssub.s32 %s11, 1
      %s205 = smul.u32 16, %s16
      %p206 = scmp.lt.s32.totalorder %s205, 47
      %s207 = scalar_select %p206, %s205, 47
      %s208 = smul.addr %s207, 8
      %s209 = scalar_lea.vmem %s0, %s208
      %p210 = pneg %p37
      %p211 = pneg %p34
      %s212 = smul.u32 16, %s16
      %p213 = scmp.lt.s32.totalorder %s212, 47
      %s214 = scalar_select %p213, %s212, 47
      %s215 = smul.addr %s214, 8
      %s216 = scalar_lea.vmem %s1, %s215
      %p217 = pneg %p63
      %p218 = pneg %p60
      %p219 = pneg %p84
      %p220 = pneg %p81
      %p221 = pneg %p105
      %p222 = pneg %p102
      %p223 = pneg %p126
      %p224 = pneg %p123
      %p225 = pneg %p152
      %p226 = pneg %p149
      %s227 = smul.u32 16, %s16
      %p228 = scmp.lt.s32.totalorder %s227, 47
      %s229 = scalar_select %p228, %s227, 47
      %s230 = smul.addr %s229, 8
      %s231 = scalar_lea.vmem %s5, %s230
      %s232 = smul.u32 16, %s16
      %p233 = scmp.lt.s32.totalorder %s232, 47
      %s234 = scalar_select %p233, %s232, 47
      %s235 = smul.addr %s234, 8
      %s236 = scalar_lea.vmem %s0, %s235
      %s237 = smul.u32 16, %s16
      %s238 = smul.u32 16, %s16
      %p239 = scmp.lt.s32.totalorder %s238, 47
      %s240 = scalar_select %p239, %s238, 47
      %s241 = smul.addr %s240, 8
      %s242 = scalar_lea.vmem %s1, %s241
      %s243 = smul.u32 16, %s16
      %s244 = smul.u32 16, %s16
      %p245 = scmp.lt.s32.totalorder %s244, 47
      %s246 = scalar_select %p245, %s244, 47
      %s247 = smul.addr %s246, 8
      %s248 = scalar_lea.vmem %s5, %s247
      %s249 = smul.u32 16, %s16
      %v250 = vlaneseq
      %v251 = vand.u32 %v250, 127
      %v252 = vld [vmem:[%s236] sm:$0xff]
      %v253 = vld [vmem:[%s236 + $0x8] sm:$0xff]
      %v254 = vld [vmem:[%s236 + $0x10] sm:$0xff]
      %v255 = vld [vmem:[%s236 + $0x18] sm:$0xff]
      %v256 = vld [vmem:[%s236 + $0x20] sm:$0xff]
      %v257 = vld [vmem:[%s236 + $0x28] sm:$0xff]
      %v258 = vld [vmem:[%s236 + $0x30] sm:$0xff]
      %v259 = vld [vmem:[%s236 + $0x38] sm:$0xff]
      %v260 = vld [vmem:[%s236 + $0x40] sm:$0xff]
      %v261 = vld [vmem:[%s236 + $0x48] sm:$0xff]
      %v262 = vld [vmem:[%s236 + $0x50] sm:$0xff]
      %v263 = vld [vmem:[%s236 + $0x58] sm:$0xff]
      %v264 = vld [vmem:[%s236 + $0x60] sm:$0xff]
      %v265 = vld [vmem:[%s236 + $0x68] sm:$0xff]
      %v266 = vld [vmem:[%s236 + $0x70] sm:$0xff]
      %v267 = vld [vmem:[%s236 + $0x78] sm:$0xff]
      %268 = vset.pattern.permute.xlu0 0
      %269 = vperm.xlu0 %268, %v252
      %v270 = vpop.permute.xlu0 %269
      %271 = vset.pattern.permute.xlu0 0
      %272 = vperm.xlu0 %271, %v253
      %v273 = vpop.permute.xlu0 %272
      %274 = vset.pattern.permute.xlu0 0
      %275 = vperm.xlu0 %274, %v254
      %v276 = vpop.permute.xlu0 %275
      %277 = vset.pattern.permute.xlu0 0
      %278 = vperm.xlu0 %277, %v255
      %v279 = vpop.permute.xlu0 %278
      %280 = vset.pattern.permute.xlu0 0
      %281 = vperm.xlu0 %280, %v256
      %v282 = vpop.permute.xlu0 %281
      %283 = vset.pattern.permute.xlu0 0
      %284 = vperm.xlu0 %283, %v257
      %v285 = vpop.permute.xlu0 %284
      %286 = vset.pattern.permute.xlu0 0
      %287 = vperm.xlu0 %286, %v258
      %v288 = vpop.permute.xlu0 %287
      %289 = vset.pattern.permute.xlu0 0
      %290 = vperm.xlu0 %289, %v259
      %v291 = vpop.permute.xlu0 %290
      %292 = vset.pattern.permute.xlu0 0
      %293 = vperm.xlu0 %292, %v260
      %v294 = vpop.permute.xlu0 %293
      %295 = vset.pattern.permute.xlu0 0
      %296 = vperm.xlu0 %295, %v261
      %v297 = vpop.permute.xlu0 %296
      %298 = vset.pattern.permute.xlu0 0
      %299 = vperm.xlu0 %298, %v262
      %v300 = vpop.permute.xlu0 %299
      %301 = vset.pattern.permute.xlu0 0
      %302 = vperm.xlu0 %301, %v263
      %v303 = vpop.permute.xlu0 %302
      %304 = vset.pattern.permute.xlu0 0
      %305 = vperm.xlu0 %304, %v264
      %v306 = vpop.permute.xlu0 %305
      %307 = vset.pattern.permute.xlu0 0
      %308 = vperm.xlu0 %307, %v265
      %v309 = vpop.permute.xlu0 %308
      %310 = vset.pattern.permute.xlu0 0
      %311 = vperm.xlu0 %310, %v266
      %v312 = vpop.permute.xlu0 %311
      %313 = vset.pattern.permute.xlu0 0
      %314 = vperm.xlu0 %313, %v267
      %v315 = vpop.permute.xlu0 %314
      %vm316 = vcmp.eq.s32.totalorder %v270, %v251
      %vm317 = vcmp.eq.s32.totalorder %v273, %v251
      %vm318 = vcmp.eq.s32.totalorder %v276, %v251
      %vm319 = vcmp.eq.s32.totalorder %v279, %v251
      %vm320 = vcmp.eq.s32.totalorder %v282, %v251
      %vm321 = vcmp.eq.s32.totalorder %v285, %v251
      %vm322 = vcmp.eq.s32.totalorder %v288, %v251
      %vm323 = vcmp.eq.s32.totalorder %v291, %v251
      %vm324 = vcmp.eq.s32.totalorder %v294, %v251
      %vm325 = vcmp.eq.s32.totalorder %v297, %v251
      %vm326 = vcmp.eq.s32.totalorder %v300, %v251
      %vm327 = vcmp.eq.s32.totalorder %v303, %v251
      %vm328 = vcmp.eq.s32.totalorder %v306, %v251
      %vm329 = vcmp.eq.s32.totalorder %v309, %v251
      %vm330 = vcmp.eq.s32.totalorder %v312, %v251
      %vm331 = vcmp.eq.s32.totalorder %v315, %v251
      %v332 = vsel %vm316, 1, 0
      %v333 = vsel %vm317, 1, 0
      %v334 = vsel %vm318, 1, 0
      %v335 = vsel %vm319, 1, 0
      %v336 = vsel %vm320, 1, 0
      %v337 = vsel %vm321, 1, 0
      %v338 = vsel %vm322, 1, 0
      %v339 = vsel %vm323, 1, 0
      %v340 = vsel %vm324, 1, 0
      %v341 = vsel %vm325, 1, 0
      %v342 = vsel %vm326, 1, 0
      %v343 = vsel %vm327, 1, 0
      %v344 = vsel %vm328, 1, 0
      %v345 = vsel %vm329, 1, 0
      %v346 = vsel %vm330, 1, 0
      %v347 = vsel %vm331, 1, 0
      %v348 = vcvt.s32.f32 %v332
      %v349 = vcvt.s32.f32 %v333
      %v350 = vcvt.s32.f32 %v334
      %v351 = vcvt.s32.f32 %v335
      %v352 = vcvt.s32.f32 %v336
      %v353 = vcvt.s32.f32 %v337
      %v354 = vcvt.s32.f32 %v338
      %v355 = vcvt.s32.f32 %v339
      %v356 = vcvt.s32.f32 %v340
      %v357 = vcvt.s32.f32 %v341
      %v358 = vcvt.s32.f32 %v342
      %v359 = vcvt.s32.f32 %v343
      %v360 = vcvt.s32.f32 %v344
      %v361 = vcvt.s32.f32 %v345
      %v362 = vcvt.s32.f32 %v346
      %v363 = vcvt.s32.f32 %v347
      %v364 = vld [vmem:[%s242] sm:$0xff]
      %v365 = vld [vmem:[%s242 + $0x8] sm:$0xff]
      %v366 = vld [vmem:[%s242 + $0x10] sm:$0xff]
      %v367 = vld [vmem:[%s242 + $0x18] sm:$0xff]
      %v368 = vld [vmem:[%s242 + $0x20] sm:$0xff]
      %v369 = vld [vmem:[%s242 + $0x28] sm:$0xff]
      %v370 = vld [vmem:[%s242 + $0x30] sm:$0xff]
      %v371 = vld [vmem:[%s242 + $0x38] sm:$0xff]
      %v372 = vld [vmem:[%s242 + $0x40] sm:$0xff]
      %v373 = vld [vmem:[%s242 + $0x48] sm:$0xff]
      %v374 = vld [vmem:[%s242 + $0x50] sm:$0xff]
      %v375 = vld [vmem:[%s242 + $0x58] sm:$0xff]
      %v376 = vld [vmem:[%s242 + $0x60] sm:$0xff]
      %v377 = vld [vmem:[%s242 + $0x68] sm:$0xff]
      %v378 = vld [vmem:[%s242 + $0x70] sm:$0xff]
      %v379 = vld [vmem:[%s242 + $0x78] sm:$0xff]
      %380 = vset.pattern.permute.xlu0 0
      %381 = vperm.xlu0 %380, %v364
      %v382 = vpop.permute.xlu0 %381
      %383 = vset.pattern.permute.xlu0 0
      %384 = vperm.xlu0 %383, %v365
      %v385 = vpop.permute.xlu0 %384
      %386 = vset.pattern.permute.xlu0 0
      %387 = vperm.xlu0 %386, %v366
      %v388 = vpop.permute.xlu0 %387
      %389 = vset.pattern.permute.xlu0 0
      %390 = vperm.xlu0 %389, %v367
      %v391 = vpop.permute.xlu0 %390
      %392 = vset.pattern.permute.xlu0 0
      %393 = vperm.xlu0 %392, %v368
      %v394 = vpop.permute.xlu0 %393
      %395 = vset.pattern.permute.xlu0 0
      %396 = vperm.xlu0 %395, %v369
      %v397 = vpop.permute.xlu0 %396
      %398 = vset.pattern.permute.xlu0 0
      %399 = vperm.xlu0 %398, %v370
      %v400 = vpop.permute.xlu0 %399
      %401 = vset.pattern.permute.xlu0 0
      %402 = vperm.xlu0 %401, %v371
      %v403 = vpop.permute.xlu0 %402
      %404 = vset.pattern.permute.xlu0 0
      %405 = vperm.xlu0 %404, %v372
      %v406 = vpop.permute.xlu0 %405
      %407 = vset.pattern.permute.xlu0 0
      %408 = vperm.xlu0 %407, %v373
      %v409 = vpop.permute.xlu0 %408
      %410 = vset.pattern.permute.xlu0 0
      %411 = vperm.xlu0 %410, %v374
      %v412 = vpop.permute.xlu0 %411
      %413 = vset.pattern.permute.xlu0 0
      %414 = vperm.xlu0 %413, %v375
      %v415 = vpop.permute.xlu0 %414
      %416 = vset.pattern.permute.xlu0 0
      %417 = vperm.xlu0 %416, %v376
      %v418 = vpop.permute.xlu0 %417
      %419 = vset.pattern.permute.xlu0 0
      %420 = vperm.xlu0 %419, %v377
      %v421 = vpop.permute.xlu0 %420
      %422 = vset.pattern.permute.xlu0 0
      %423 = vperm.xlu0 %422, %v378
      %v424 = vpop.permute.xlu0 %423
      %425 = vset.pattern.permute.xlu0 0
      %426 = vperm.xlu0 %425, %v379
      %v427 = vpop.permute.xlu0 %426
      %vm428 = vcmp.eq.s32.totalorder %v382, %v251
      %vm429 = vcmp.eq.s32.totalorder %v385, %v251
      %vm430 = vcmp.eq.s32.totalorder %v388, %v251
      %vm431 = vcmp.eq.s32.totalorder %v391, %v251
      %vm432 = vcmp.eq.s32.totalorder %v394, %v251
      %vm433 = vcmp.eq.s32.totalorder %v397, %v251
      %vm434 = vcmp.eq.s32.totalorder %v400, %v251
      %vm435 = vcmp.eq.s32.totalorder %v403, %v251
      %vm436 = vcmp.eq.s32.totalorder %v406, %v251
      %vm437 = vcmp.eq.s32.totalorder %v409, %v251
      %vm438 = vcmp.eq.s32.totalorder %v412, %v251
      %vm439 = vcmp.eq.s32.totalorder %v415, %v251
      %vm440 = vcmp.eq.s32.totalorder %v418, %v251
      %vm441 = vcmp.eq.s32.totalorder %v421, %v251
      %vm442 = vcmp.eq.s32.totalorder %v424, %v251
      %vm443 = vcmp.eq.s32.totalorder %v427, %v251
      %v444 = vsel %vm428, 1, 0
      %v445 = vsel %vm429, 1, 0
      %v446 = vsel %vm430, 1, 0
      %v447 = vsel %vm431, 1, 0
      %v448 = vsel %vm432, 1, 0
      %v449 = vsel %vm433, 1, 0
      %v450 = vsel %vm434, 1, 0
      %v451 = vsel %vm435, 1, 0
      %v452 = vsel %vm436, 1, 0
      %v453 = vsel %vm437, 1, 0
      %v454 = vsel %vm438, 1, 0
      %v455 = vsel %vm439, 1, 0
      %v456 = vsel %vm440, 1, 0
      %v457 = vsel %vm441, 1, 0
      %v458 = vsel %vm442, 1, 0
      %v459 = vsel %vm443, 1, 0
      %v460 = vcvt.s32.f32 %v444
      %v461 = vcvt.s32.f32 %v445
      %v462 = vcvt.s32.f32 %v446
      %v463 = vcvt.s32.f32 %v447
      %v464 = vcvt.s32.f32 %v448
      %v465 = vcvt.s32.f32 %v449
      %v466 = vcvt.s32.f32 %v450
      %v467 = vcvt.s32.f32 %v451
      %v468 = vcvt.s32.f32 %v452
      %v469 = vcvt.s32.f32 %v453
      %v470 = vcvt.s32.f32 %v454
      %v471 = vcvt.s32.f32 %v455
      %v472 = vcvt.s32.f32 %v456
      %v473 = vcvt.s32.f32 %v457
      %v474 = vcvt.s32.f32 %v458
      %v475 = vcvt.s32.f32 %v459
      %v476 = vld [vmem:[%s2] sm:$0xff]
      %v477 = vld [vmem:[%s2 + $0x8] sm:$0xff]
      %v478 = vld [vmem:[%s2 + $0x10] sm:$0xff]
      %v479 = vld [vmem:[%s2 + $0x18] sm:$0xff]
      %v480 = vld [vmem:[%s2 + $0x20] sm:$0xff]
      %v481 = vld [vmem:[%s2 + $0x28] sm:$0xff]
      %v482 = vld [vmem:[%s2 + $0x30] sm:$0xff]
      %v483 = vld [vmem:[%s2 + $0x38] sm:$0xff]
      %v484 = vld [vmem:[%s2 + $0x40] sm:$0xff]
      %v485 = vld [vmem:[%s2 + $0x48] sm:$0xff]
      %v486 = vld [vmem:[%s2 + $0x50] sm:$0xff]
      %v487 = vld [vmem:[%s2 + $0x58] sm:$0xff]
      %v488 = vld [vmem:[%s2 + $0x60] sm:$0xff]
      %v489 = vld [vmem:[%s2 + $0x68] sm:$0xff]
      %v490 = vld [vmem:[%s2 + $0x70] sm:$0xff]
      %v491 = vld [vmem:[%s2 + $0x78] sm:$0xff]
      %492 = vmatpush.msra.mxu0 %v491
      %493 = vmatpush.msra.mxu0 %v490
      %494 = vmatpush.msra.mxu0 %v489
      %495 = vmatpush.msra.mxu0 %v488
      %496 = vmatpush.msra.mxu0 %v487
      %497 = vmatpush.msra.mxu0 %v486
      %498 = vmatpush.msra.mxu0 %v485
      %499 = vmatpush.msra.mxu0 %v484
      %500 = vmatpush.msra.mxu0 %v483
      %501 = vmatpush.msra.mxu0 %v482
      %502 = vmatpush.msra.mxu0 %v481
      %503 = vmatpush.msra.mxu0 %v480
      %504 = vmatpush.msra.mxu0 %v479
      %505 = vmatpush.msra.mxu0 %v478
      %506 = vmatpush.msra.mxu0 %v477
      %507 = vmatpush.msra.mxu0 %v476
      %508 = vmatmul.f32.gmra.mxu0 %v348
      %v509 = vpop.f32.mrf.mxu0
      %v510 = vadd.f32 0.0, %v509
      %511 = vmatmul.f32.gmra.mxu0 %v349
      %v512 = vpop.f32.mrf.mxu0
      %v513 = vadd.f32 0.0, %v512
      %514 = vmatmul.f32.gmra.mxu0 %v350
      %v515 = vpop.f32.mrf.mxu0
      %v516 = vadd.f32 0.0, %v515
      %517 = vmatmul.f32.gmra.mxu0 %v351
      %v518 = vpop.f32.mrf.mxu0
      %v519 = vadd.f32 0.0, %v518
      %520 = vmatmul.f32.gmra.mxu0 %v352
      %v521 = vpop.f32.mrf.mxu0
      %v522 = vadd.f32 0.0, %v521
      %523 = vmatmul.f32.gmra.mxu0 %v353
      %v524 = vpop.f32.mrf.mxu0
      %v525 = vadd.f32 0.0, %v524
      %526 = vmatmul.f32.gmra.mxu0 %v354
      %v527 = vpop.f32.mrf.mxu0
      %v528 = vadd.f32 0.0, %v527
      %529 = vmatmul.f32.gmra.mxu0 %v355
      %v530 = vpop.f32.mrf.mxu0
      %v531 = vadd.f32 0.0, %v530
      %532 = vmatmul.f32.gmra.mxu0 %v356
      %v533 = vpop.f32.mrf.mxu0
      %v534 = vadd.f32 0.0, %v533
      %535 = vmatmul.f32.gmra.mxu0 %v357
      %v536 = vpop.f32.mrf.mxu0
      %v537 = vadd.f32 0.0, %v536
      %538 = vmatmul.f32.gmra.mxu0 %v358
      %v539 = vpop.f32.mrf.mxu0
      %v540 = vadd.f32 0.0, %v539
      %541 = vmatmul.f32.gmra.mxu0 %v359
      %v542 = vpop.f32.mrf.mxu0
      %v543 = vadd.f32 0.0, %v542
      %544 = vmatmul.f32.gmra.mxu0 %v360
      %v545 = vpop.f32.mrf.mxu0
      %v546 = vadd.f32 0.0, %v545
      %547 = vmatmul.f32.gmra.mxu0 %v361
      %v548 = vpop.f32.mrf.mxu0
      %v549 = vadd.f32 0.0, %v548
      %550 = vmatmul.f32.gmra.mxu0 %v362
      %v551 = vpop.f32.mrf.mxu0
      %v552 = vadd.f32 0.0, %v551
      %553 = vmatmul.f32.gmra.mxu0 %v363
      %v554 = vpop.f32.mrf.mxu0
      %v555 = vadd.f32 0.0, %v554
      %556 = vdwg.mxu0
      %557 = vmatpush.msra.mxu0 %v491
      %558 = vmatpush.msra.mxu0 %v490
      %559 = vmatpush.msra.mxu0 %v489
      %560 = vmatpush.msra.mxu0 %v488
      %561 = vmatpush.msra.mxu0 %v487
      %562 = vmatpush.msra.mxu0 %v486
      %563 = vmatpush.msra.mxu0 %v485
      %564 = vmatpush.msra.mxu0 %v484
      %565 = vmatpush.msra.mxu0 %v483
      %566 = vmatpush.msra.mxu0 %v482
      %567 = vmatpush.msra.mxu0 %v481
      %568 = vmatpush.msra.mxu0 %v480
      %569 = vmatpush.msra.mxu0 %v479
      %570 = vmatpush.msra.mxu0 %v478
      %571 = vmatpush.msra.mxu0 %v477
      %572 = vmatpush.msra.mxu0 %v476
      %573 = vmatmul.f32.gmra.mxu0 %v460
      %v574 = vpop.f32.mrf.mxu0
      %v575 = vadd.f32 0.0, %v574
      %576 = vmatmul.f32.gmra.mxu0 %v461
      %v577 = vpop.f32.mrf.mxu0
      %v578 = vadd.f32 0.0, %v577
      %579 = vmatmul.f32.gmra.mxu0 %v462
      %v580 = vpop.f32.mrf.mxu0
      %v581 = vadd.f32 0.0, %v580
      %582 = vmatmul.f32.gmra.mxu0 %v463
      %v583 = vpop.f32.mrf.mxu0
      %v584 = vadd.f32 0.0, %v583
      %585 = vmatmul.f32.gmra.mxu0 %v464
      %v586 = vpop.f32.mrf.mxu0
      %v587 = vadd.f32 0.0, %v586
      %588 = vmatmul.f32.gmra.mxu0 %v465
      %v589 = vpop.f32.mrf.mxu0
      %v590 = vadd.f32 0.0, %v589
      %591 = vmatmul.f32.gmra.mxu0 %v466
      %v592 = vpop.f32.mrf.mxu0
      %v593 = vadd.f32 0.0, %v592
      %594 = vmatmul.f32.gmra.mxu0 %v467
      %v595 = vpop.f32.mrf.mxu0
      %v596 = vadd.f32 0.0, %v595
      %597 = vmatmul.f32.gmra.mxu0 %v468
      %v598 = vpop.f32.mrf.mxu0
      %v599 = vadd.f32 0.0, %v598
      %600 = vmatmul.f32.gmra.mxu0 %v469
      %v601 = vpop.f32.mrf.mxu0
      %v602 = vadd.f32 0.0, %v601
      %603 = vmatmul.f32.gmra.mxu0 %v470
      %v604 = vpop.f32.mrf.mxu0
      %v605 = vadd.f32 0.0, %v604
      %606 = vmatmul.f32.gmra.mxu0 %v471
      %v607 = vpop.f32.mrf.mxu0
      %v608 = vadd.f32 0.0, %v607
      %609 = vmatmul.f32.gmra.mxu0 %v472
      %v610 = vpop.f32.mrf.mxu0
      %v611 = vadd.f32 0.0, %v610
      %612 = vmatmul.f32.gmra.mxu0 %v473
      %v613 = vpop.f32.mrf.mxu0
      %v614 = vadd.f32 0.0, %v613
      %615 = vmatmul.f32.gmra.mxu0 %v474
      %v616 = vpop.f32.mrf.mxu0
      %v617 = vadd.f32 0.0, %v616
      %618 = vmatmul.f32.gmra.mxu0 %v475
      %v619 = vpop.f32.mrf.mxu0
      %v620 = vadd.f32 0.0, %v619
      %621 = vdwg.mxu0
      %v622 = vld [vmem:[%s3] sm:$0xff]
      %v623 = vld [vmem:[%s3 + $0x8] sm:$0xff]
      %v624 = vld [vmem:[%s3 + $0x10] sm:$0xff]
      %v625 = vld [vmem:[%s3 + $0x18] sm:$0xff]
      %v626 = vld [vmem:[%s3 + $0x20] sm:$0xff]
      %v627 = vld [vmem:[%s3 + $0x28] sm:$0xff]
      %v628 = vld [vmem:[%s3 + $0x30] sm:$0xff]
      %v629 = vld [vmem:[%s3 + $0x38] sm:$0xff]
      %v630 = vld [vmem:[%s3 + $0x40] sm:$0xff]
      %v631 = vld [vmem:[%s3 + $0x48] sm:$0xff]
      %v632 = vld [vmem:[%s3 + $0x50] sm:$0xff]
      %v633 = vld [vmem:[%s3 + $0x58] sm:$0xff]
      %v634 = vld [vmem:[%s3 + $0x60] sm:$0xff]
      %v635 = vld [vmem:[%s3 + $0x68] sm:$0xff]
      %v636 = vld [vmem:[%s3 + $0x70] sm:$0xff]
      %v637 = vld [vmem:[%s3 + $0x78] sm:$0xff]
      %v638 = vld [vmem:[%s3 + $0x80] sm:$0xff]
      %v639 = vld [vmem:[%s3 + $0x88] sm:$0xff]
      %v640 = vld [vmem:[%s3 + $0x90] sm:$0xff]
      %v641 = vld [vmem:[%s3 + $0x98] sm:$0xff]
      %v642 = vld [vmem:[%s3 + $0xa0] sm:$0xff]
      %v643 = vld [vmem:[%s3 + $0xa8] sm:$0xff]
      %v644 = vld [vmem:[%s3 + $0xb0] sm:$0xff]
      %v645 = vld [vmem:[%s3 + $0xb8] sm:$0xff]
      %v646 = vld [vmem:[%s3 + $0xc0] sm:$0xff]
      %v647 = vld [vmem:[%s3 + $0xc8] sm:$0xff]
      %v648 = vld [vmem:[%s3 + $0xd0] sm:$0xff]
      %v649 = vld [vmem:[%s3 + $0xd8] sm:$0xff]
      %v650 = vld [vmem:[%s3 + $0xe0] sm:$0xff]
      %v651 = vld [vmem:[%s3 + $0xe8] sm:$0xff]
      %v652 = vld [vmem:[%s3 + $0xf0] sm:$0xff]
      %v653 = vld [vmem:[%s3 + $0xf8] sm:$0xff]
      %v654 = vld [vmem:[%s4] sm:$0x1]
      %v656 = vperm.slane %v654, 0
      %658 = vmatpush.msra.mxu0 %v637
      %659 = vmatpush.msra.mxu0 %v636
      %660 = vmatpush.msra.mxu0 %v635
      %661 = vmatpush.msra.mxu0 %v634
      %662 = vmatpush.msra.mxu0 %v633
      %663 = vmatpush.msra.mxu0 %v632
      %664 = vmatpush.msra.mxu0 %v631
      %665 = vmatpush.msra.mxu0 %v630
      %666 = vmatpush.msra.mxu0 %v629
      %667 = vmatpush.msra.mxu0 %v628
      %668 = vmatpush.msra.mxu0 %v627
      %669 = vmatpush.msra.mxu0 %v626
      %670 = vmatpush.msra.mxu0 %v625
      %671 = vmatpush.msra.mxu0 %v624
      %672 = vmatpush.msra.mxu0 %v623
      %673 = vmatpush.msra.mxu0 %v622
      %674 = vmatmul.f32.gmra.mxu0 %v510
      %v675 = vpop.f32.mrf.mxu0
      %v676 = vadd.f32 %v656, %v675
      %677 = vmatmul.f32.gmra.mxu0 %v513
      %v678 = vpop.f32.mrf.mxu0
      %v679 = vadd.f32 %v656, %v678
      %680 = vmatmul.f32.gmra.mxu0 %v516
      %v681 = vpop.f32.mrf.mxu0
      %v682 = vadd.f32 %v656, %v681
      %683 = vmatmul.f32.gmra.mxu0 %v519
      %v684 = vpop.f32.mrf.mxu0
      %v685 = vadd.f32 %v656, %v684
      %686 = vmatmul.f32.gmra.mxu0 %v522
      %v687 = vpop.f32.mrf.mxu0
      %v688 = vadd.f32 %v656, %v687
      %689 = vmatmul.f32.gmra.mxu0 %v525
      %v690 = vpop.f32.mrf.mxu0
      %v691 = vadd.f32 %v656, %v690
      %692 = vmatmul.f32.gmra.mxu0 %v528
      %v693 = vpop.f32.mrf.mxu0
      %v694 = vadd.f32 %v656, %v693
      %695 = vmatmul.f32.gmra.mxu0 %v531
      %v696 = vpop.f32.mrf.mxu0
      %v697 = vadd.f32 %v656, %v696
      %698 = vmatmul.f32.gmra.mxu0 %v534
      %v699 = vpop.f32.mrf.mxu0
      %v700 = vadd.f32 %v656, %v699
      %701 = vmatmul.f32.gmra.mxu0 %v537
      %v702 = vpop.f32.mrf.mxu0
      %v703 = vadd.f32 %v656, %v702
      %704 = vmatmul.f32.gmra.mxu0 %v540
      %v705 = vpop.f32.mrf.mxu0
      %v706 = vadd.f32 %v656, %v705
      %707 = vmatmul.f32.gmra.mxu0 %v543
      %v708 = vpop.f32.mrf.mxu0
      %v709 = vadd.f32 %v656, %v708
      %710 = vmatmul.f32.gmra.mxu0 %v546
      %v711 = vpop.f32.mrf.mxu0
      %v712 = vadd.f32 %v656, %v711
      %713 = vmatmul.f32.gmra.mxu0 %v549
      %v714 = vpop.f32.mrf.mxu0
      %v715 = vadd.f32 %v656, %v714
      %716 = vmatmul.f32.gmra.mxu0 %v552
      %v717 = vpop.f32.mrf.mxu0
      %v718 = vadd.f32 %v656, %v717
      %719 = vmatmul.f32.gmra.mxu0 %v555
      %v720 = vpop.f32.mrf.mxu0
      %v721 = vadd.f32 %v656, %v720
      %722 = vdwg.mxu0
      %723 = vmatpush.msra.mxu0 %v653
      %724 = vmatpush.msra.mxu0 %v652
      %725 = vmatpush.msra.mxu0 %v651
      %726 = vmatpush.msra.mxu0 %v650
      %727 = vmatpush.msra.mxu0 %v649
      %728 = vmatpush.msra.mxu0 %v648
      %729 = vmatpush.msra.mxu0 %v647
      %730 = vmatpush.msra.mxu0 %v646
      %731 = vmatpush.msra.mxu0 %v645
      %732 = vmatpush.msra.mxu0 %v644
      %733 = vmatpush.msra.mxu0 %v643
      %734 = vmatpush.msra.mxu0 %v642
      %735 = vmatpush.msra.mxu0 %v641
      %736 = vmatpush.msra.mxu0 %v640
      %737 = vmatpush.msra.mxu0 %v639
      %738 = vmatpush.msra.mxu0 %v638
      %739 = vmatmul.f32.gmra.mxu0 %v575
      %v740 = vpop.f32.mrf.mxu0
      %v741 = vadd.f32 %v676, %v740
      %742 = vmatmul.f32.gmra.mxu0 %v578
      %v743 = vpop.f32.mrf.mxu0
      %v744 = vadd.f32 %v679, %v743
      %745 = vmatmul.f32.gmra.mxu0 %v581
      %v746 = vpop.f32.mrf.mxu0
      %v747 = vadd.f32 %v682, %v746
      %748 = vmatmul.f32.gmra.mxu0 %v584
      %v749 = vpop.f32.mrf.mxu0
      %v750 = vadd.f32 %v685, %v749
      %751 = vmatmul.f32.gmra.mxu0 %v587
      %v752 = vpop.f32.mrf.mxu0
      %v753 = vadd.f32 %v688, %v752
      %754 = vmatmul.f32.gmra.mxu0 %v590
      %v755 = vpop.f32.mrf.mxu0
      %v756 = vadd.f32 %v691, %v755
      %757 = vmatmul.f32.gmra.mxu0 %v593
      %v758 = vpop.f32.mrf.mxu0
      %v759 = vadd.f32 %v694, %v758
      %760 = vmatmul.f32.gmra.mxu0 %v596
      %v761 = vpop.f32.mrf.mxu0
      %v762 = vadd.f32 %v697, %v761
      %763 = vmatmul.f32.gmra.mxu0 %v599
      %v764 = vpop.f32.mrf.mxu0
      %v765 = vadd.f32 %v700, %v764
      %766 = vmatmul.f32.gmra.mxu0 %v602
      %v767 = vpop.f32.mrf.mxu0
      %v768 = vadd.f32 %v703, %v767
      %769 = vmatmul.f32.gmra.mxu0 %v605
      %v770 = vpop.f32.mrf.mxu0
      %v771 = vadd.f32 %v706, %v770
      %772 = vmatmul.f32.gmra.mxu0 %v608
      %v773 = vpop.f32.mrf.mxu0
      %v774 = vadd.f32 %v709, %v773
      %775 = vmatmul.f32.gmra.mxu0 %v611
      %v776 = vpop.f32.mrf.mxu0
      %v777 = vadd.f32 %v712, %v776
      %778 = vmatmul.f32.gmra.mxu0 %v614
      %v779 = vpop.f32.mrf.mxu0
      %v780 = vadd.f32 %v715, %v779
      %781 = vmatmul.f32.gmra.mxu0 %v617
      %v782 = vpop.f32.mrf.mxu0
      %v783 = vadd.f32 %v718, %v782
      %784 = vmatmul.f32.gmra.mxu0 %v620
      %v785 = vpop.f32.mrf.mxu0
      %v786 = vadd.f32 %v721, %v785
      %787 = vdwg.mxu0
      %vm788 = vcmask 39936
      %789 = vst.msk [vmem:[%s248] sm:$0xff] %vm788, %v741
      %790 = vst.msk [vmem:[%s248 + $0x8] sm:$0xff] %vm788, %v744
      %791 = vst.msk [vmem:[%s248 + $0x10] sm:$0xff] %vm788, %v747
      %792 = vst.msk [vmem:[%s248 + $0x18] sm:$0xff] %vm788, %v750
      %793 = vst.msk [vmem:[%s248 + $0x20] sm:$0xff] %vm788, %v753
      %794 = vst.msk [vmem:[%s248 + $0x28] sm:$0xff] %vm788, %v756
      %795 = vst.msk [vmem:[%s248 + $0x30] sm:$0xff] %vm788, %v759
      %796 = vst.msk [vmem:[%s248 + $0x38] sm:$0xff] %vm788, %v762
      %797 = vst.msk [vmem:[%s248 + $0x40] sm:$0xff] %vm788, %v765
      %798 = vst.msk [vmem:[%s248 + $0x48] sm:$0xff] %vm788, %v768
      %799 = vst.msk [vmem:[%s248 + $0x50] sm:$0xff] %vm788, %v771
      %800 = vst.msk [vmem:[%s248 + $0x58] sm:$0xff] %vm788, %v774
      %801 = vst.msk [vmem:[%s248 + $0x60] sm:$0xff] %vm788, %v777
      %802 = vst.msk [vmem:[%s248 + $0x68] sm:$0xff] %vm788, %v780
      %803 = vst.msk [vmem:[%s248 + $0x70] sm:$0xff] %vm788, %v783
      %804 = vst.msk [vmem:[%s248 + $0x78] sm:$0xff] %vm788, %v786
      %s805 = smul.u32 16, %s16
      %p806 = scmp.lt.s32.totalorder %s805, 47
      %s807 = scalar_select %p806, %s805, 47
      %s808 = smul.addr %s807, 8
      %s809 = scalar_lea.vmem %s5, %s808
      // Predicated region
      $region41: #{tpu_custom_call.1} parent=39 // pred_check
        %p810 = pneg %p149
      $region42: #{tpu_custom_call.1} parent=39 // pred_check_branch
        %812 = sbr.rel (%p810) target = $region44
      $region43: #{tpu_custom_call.1} parent=39 // pred_region
        %s813 = smul.u32 16, %s16
      $region44: #{tpu_custom_call.1} parent=39 // pred_fallthru
        _
    $region40: #{tpu_custom_call.1} parent=5 // pred_fallthru
      _
    %p814 = scmp.le.s32.totalorder 2, %s11
    // Predicated region
    $region45: #{tpu_custom_call.1} parent=5 // pred_check
      %p815 = pneg %p814
    $region46: #{tpu_custom_call.1} parent=5 // pred_check_branch
      %817 = sbr.rel (%p815) target = $region48
    $region47: #{tpu_custom_call.1} parent=5 // pred_region
      %s818 = ssub.s32 %s11, 2
      // Predicated region
      $region49: #{tpu_custom_call.1} parent=47 // pred_check
        %p819 = pneg %p155
      $region50: #{tpu_custom_call.1} parent=47 // pred_check_branch
        %821 = sbr.rel (%p819) target = $region52
      $region51: #{tpu_custom_call.1} parent=47 // pred_region
        %s822 = smul.u32 16, %s17
        %p823 = scmp.lt.s32.totalorder %s822, 47
        %s824 = scalar_select %p823, %s822, 47
        %s825 = smul.addr %s824, 8
        %s826 = scalar_lea.vmem %s5, %s825
      $region52: #{tpu_custom_call.1} parent=47 // pred_fallthru
        _
    $region48: #{tpu_custom_call.1} parent=5 // pred_fallthru
      _
  $region6: #{tpu_custom_call.1} parent=0 // loop_footer
    %s15 = sadd.s32 1, %s11
  $region7: #{tpu_custom_call.1} parent=0 // loop_footer_branch
    %10 = sbr.rel target = $region3
  $region8: #{tpu_custom_call.1} parent=0 // loop_exit
    _

</llo_original>
